<compile_context>
chip_gen: v5e
topology: v5e:2x2
jax: 0.10.0
libtpu: 0.0.40
codegen_flags: <defaults>
</compile_context>

<pallas_src>
import functools

import numpy as np
import jax
import jax.numpy as jnp
from jax.experimental import pallas as pl
from jax.experimental.pallas import tpu as pltpu

# Deterministic parameters (match the PyTorch __init__):
#   k = [0.05, 0.25, 0.4, 0.25, 0.05];  kernel = outer(k, k) per channel.
_K1D = np.array([0.05, 0.25, 0.4, 0.25, 0.05], dtype=np.float64)
_K2D = np.outer(_K1D, _K1D)          # only used by the pure-JAX reference
_FLAT_HW_MAX = 2048                  # flattened-plane path when H*W <= this


# --------------------------- operator construction -------------------------
def _conv1d_matrix(n):
    """(n, n) matrix M with (M @ v)[i] = sum_t k[t] * v[clamp(i + t - 2)],
    i.e. the 1-D 5-tap gaussian with replicate padding along one axis."""
    m = np.zeros((n, n), dtype=np.float64)
    for i in range(n):
        for t in range(5):
            src = min(max(i + t - 2, 0), n - 1)
            m[i, src] += _K1D[t]
    return m


def _laplacian_matrices(h, w):
    """lap(d) = d - AA @ d @ MM for one (h, w) plane.

    AA/MM fold: gaussian conv (replicate pad) -> even-index mask * 4 ->
    gaussian conv, separated per axis (the 5x5 kernel is an outer product)."""
    a = _conv1d_matrix(h)        # acts on rows, from the left
    b = _conv1d_matrix(w).T      # acts on cols, from the right
    d_h = np.diag((np.arange(h) % 2 == 0).astype(np.float64))
    d_w = np.diag((np.arange(w) % 2 == 0).astype(np.float64))
    aa = 4.0 * (a @ d_h @ a)
    mm = b @ d_w @ b
    return aa, mm


@functools.lru_cache(maxsize=None)
def _flat_operator(h, w):
    """K with lap(d) rows = d_row - d_row @ K for row-major flattened planes:
    K[k*W+l, i*W+j] = AA[i,k] * MM[l,j]  ==  np.kron(AA.T, MM)."""
    aa, mm = _laplacian_matrices(h, w)
    k = np.kron(aa.T, mm)
    return jnp.asarray(k, dtype=jnp.bfloat16)


@functools.lru_cache(maxsize=None)
def _plane_operators(h, w):
    aa, mm = _laplacian_matrices(h, w)
    return (jnp.asarray(aa, dtype=jnp.bfloat16),
            jnp.asarray(mm, dtype=jnp.bfloat16))


# ------------------------------- sizing ------------------------------------
def _chip_vmem_limit():
    """Generation-aware scoped-VMEM limit: ~48 MiB on v7x (64 MiB physical per
    TensorCore), 64 MiB on v5e/v6e (128 MiB physical)."""
    try:
        phys = int(pltpu.get_tpu_info().vmem_capacity_bytes)
    except Exception:
        phys = 64 << 20          # assume the tightest chip (v7x per-core VMEM)
    return (48 << 20) if phys <= (64 << 20) else (64 << 20)


def _pick_row_block(nc, hw, itemsize, budget_bytes):
    """Rows (flattened planes) per grid step: large enough to amortize the
    ~0.35us per-step overhead and reach the HBM roofline, small enough that
    double-buffered x/y blocks plus in-kernel f32/bf16 temporaries fit."""
    row_bytes = hw * (2 * 2 * itemsize + 16)   # x,y double-buffered + d/t/lap
    tr = budget_bytes // max(row_bytes, 1)
    tr = int(max(8, min(tr, 1024)))
    tr -= tr % 8
    nc8 = ((nc + 7) // 8) * 8
    return min(tr, nc8)


# ------------------------------- kernels ------------------------------------
def _edge_loss_flat_kernel(x_ref, y_ref, k_ref, out_ref):
    # x_ref/y_ref: (TR, HW) input dtype; k_ref: (HW, HW) bf16, single-buffered.
    d = x_ref[...].astype(jnp.float32) - y_ref[...].astype(jnp.float32)
    # Whole 2-D laplacian of the difference as ONE bf16 MXU matmul (f32 acc):
    # lap rows = d_row - d_row @ K.
    t = jnp.dot(d.astype(jnp.bfloat16), k_ref[...],
                preferred_element_type=jnp.float32)
    lap = d - t
    # Lane-dense per-column partial sums (sublane reduce only); the final
    # contiguous sum happens in plain JAX.
    out_ref[0] = jnp.sum(lap * lap, axis=0, keepdims=True)


def _edge_loss_plane_kernel(x_ref, y_ref, aa_ref, mm_ref, out_ref):
    # x_ref/y_ref: (1, H, W); aa_ref: (H, H) bf16; mm_ref: (W, W) bf16.
    d = x_ref[0].astype(jnp.float32) - y_ref[0].astype(jnp.float32)
    t = jnp.dot(d.astype(jnp.bfloat16), mm_ref[...],
                preferred_element_type=jnp.float32)             # column pass
    u = jnp.dot(aa_ref[...], t.astype(jnp.bfloat16),
                preferred_element_type=jnp.float32)             # row pass
    lap = d - u
    out_ref[0] = jnp.sum(lap * lap, axis=0, keepdims=True)


# ------------------------------- wrappers -----------------------------------
def _edge_loss_flat(x, y, vmem_limit):
    n, c, h, w = x.shape
    nc, hw = n * c, h * w
    k_mat = _flat_operator(h, w)                              # (hw, hw) bf16
    budget = max(int(vmem_limit * 0.7) - 2 * hw * hw - (2 << 20), 1 << 20)
    tr = _pick_row_block(nc, hw, x.dtype.itemsize, budget)
    g = pl.cdiv(nc, tr)
    nc_pad = g * tr

    xr = x.reshape(nc, hw)                                    # contiguous view
    yr = y.reshape(nc, hw)
    if nc_pad != nc:
        # Zero-padded rows have lap == 0 and contribute nothing to the sum.
        xr = jnp.pad(xr, ((0, nc_pad - nc), (0, 0)))
        yr = jnp.pad(yr, ((0, nc_pad - nc), (0, 0)))

    partials = pl.pallas_call(
        _edge_loss_flat_kernel,
        out_shape=jax.ShapeDtypeStruct((g, 1, hw), jnp.float32),
        grid_spec=pltpu.PrefetchScalarGridSpec(
            num_scalar_prefetch=0,
            grid=(g,),
            in_specs=[
                pl.BlockSpec((tr, hw), lambda i: (i, 0)),
                pl.BlockSpec((tr, hw), lambda i: (i, 0)),
                # Grid-invariant operator: single buffer.
                pl.BlockSpec((hw, hw), lambda i: (0, 0),
                             pipeline_mode=pl.Buffered(buffer_count=1)),
            ],
            out_specs=pl.BlockSpec((1, 1, hw), lambda i: (i, 0, 0)),
        ),
        # TODO(synk): use pltpu.CORE_PARALLEL on v7x (2 TensorCores); plain
        # "parallel" kept here for portability across v5e/v6e.
        compiler_params=pltpu.CompilerParams(
            dimension_semantics=("parallel",),
            vmem_limit_bytes=vmem_limit,
        ),
    )(xr, yr, k_mat)
    return jnp.sum(partials)


def _edge_loss_planes(x, y, vmem_limit):
    n, c, h, w = x.shape
    nc = n * c
    aa, mm = _plane_operators(h, w)
    xr = x.reshape(nc, h, w)
    yr = y.reshape(nc, h, w)

    # TODO(synk): for very large planes (e.g. 1080x1920) row-tile with a +-4
    # halo and do the column pass as a banded stencil instead of a dense WxW
    # matmul (dense MM costs O(W) MACs/element and W^2 bf16 bytes of VMEM).
    partials = pl.pallas_call(
        _edge_loss_plane_kernel,
        out_shape=jax.ShapeDtypeStruct((nc, 1, w), jnp.float32),
        grid_spec=pltpu.PrefetchScalarGridSpec(
            num_scalar_prefetch=0,
            grid=(nc,),
            in_specs=[
                pl.BlockSpec((1, h, w), lambda p: (p, 0, 0)),
                pl.BlockSpec((1, h, w), lambda p: (p, 0, 0)),
                pl.BlockSpec((h, h), lambda p: (0, 0),
                             pipeline_mode=pl.Buffered(buffer_count=1)),
                pl.BlockSpec((w, w), lambda p: (0, 0),
                             pipeline_mode=pl.Buffered(buffer_count=1)),
            ],
            out_specs=pl.BlockSpec((1, 1, w), lambda p: (p, 0, 0)),
        ),
        compiler_params=pltpu.CompilerParams(
            dimension_semantics=("parallel",),
            vmem_limit_bytes=vmem_limit,
        ),
    )(xr, yr, aa, mm)
    return jnp.sum(partials)


def edge_loss(x, y, loss_weight=1.0):
    """EdgeLoss.forward(x, y) = mean((lap(x) - lap(y))**2) * loss_weight."""
    assert x.shape == y.shape
    n, c, h, w = x.shape
    assert c == 3, "EdgeLoss builds a 3-channel depthwise gaussian kernel"
    vmem_limit = _chip_vmem_limit()
    if h * w <= _FLAT_HW_MAX:
        total = _edge_loss_flat(x, y, vmem_limit)
    else:
        total = _edge_loss_planes(x, y, vmem_limit)
    return total / jnp.float32(n * c * h * w) * loss_weight


# ---- pure-JAX reference (faithful to the PyTorch module, for checking) ----
def _ref_conv_gauss(img):  # img: (NC, H, W)
    nc, h, w = img.shape
    p = jnp.pad(img, ((0, 0), (2, 2), (2, 2)), mode='edge')
    out = jnp.zeros_like(img)
    for dy in range(5):
        for dx in range(5):
            out = out + float(_K2D[dy, dx]) * p[:, dy:dy + h, dx:dx + w]
    return out


def _ref_laplacian(img):
    nc, h, w = img.shape
    filt = _ref_conv_gauss(img)
    rows = jax.lax.broadcasted_iota(jnp.int32, (h, w), 0)
    cols = jax.lax.broadcasted_iota(jnp.int32, (h, w), 1)
    even = ((rows % 2) == 0) & ((cols % 2) == 0)
    new_filter = jnp.where(even[None], filt * 4.0, 0.0)
    return img - _ref_conv_gauss(new_filter)


def _ref_edge_loss(x, y, loss_weight=1.0):
    n, c, h, w = x.shape
    xr = x.reshape(n * c, h, w).astype(jnp.float32)
    yr = y.reshape(n * c, h, w).astype(jnp.float32)
    d = _ref_laplacian(xr) - _ref_laplacian(yr)
    return jnp.mean(d * d) * loss_weight


if __name__ == "__main__":
    key = jax.random.PRNGKey(0)
    k1, k2, k3, k4 = jax.random.split(key, 4)

    # Small-plane path: each (16,16) plane flattens to one 256-lane row, so the
    # whole laplacian is a single bf16 MXU matmul against a 256x256 operator.
    x1 = jax.random.uniform(k1, (2, 3, 16, 16), dtype=jnp.float32)
    y1 = jax.random.uniform(k2, (2, 3, 16, 16), dtype=jnp.float32)
    out1 = jax.block_until_ready(edge_loss(x1, y1))
    ref1 = jax.block_until_ready(_ref_edge_loss(x1, y1))
    np.testing.assert_allclose(np.asarray(out1), np.asarray(ref1),
                               rtol=5e-3, atol=1e-6)

    # Large-plane path: per-plane separable two-matmul laplacian.
    x2 = jax.random.uniform(k3, (1, 3, 40, 64), dtype=jnp.float32)
    y2 = jax.random.uniform(k4, (1, 3, 40, 64), dtype=jnp.float32)
    out2 = jax.block_until_ready(edge_loss(x2, y2))
    ref2 = jax.block_until_ready(_ref_edge_loss(x2, y2))
    np.testing.assert_allclose(np.asarray(out2), np.asarray(ref2),
                               rtol=5e-3, atol=1e-6)

    print("KERNEL_OK")
</pallas_src>

<mosaic_0001>
module attributes {stable_mosaic.version = 11 : i64} {
  func.func @_edge_loss_flat_kernel(%arg0: i32, %arg1: memref<8x256xf32, #tpu.memory_space<vmem>>, %arg2: memref<8x256xf32, #tpu.memory_space<vmem>>, %arg3: memref<256x256xbf16, #tpu.memory_space<vmem>>, %arg4: memref<1x1x256xf32, #tpu.memory_space<vmem>>) attributes {dimension_semantics = [#tpu.dimension_semantics<parallel>], iteration_bounds = array<i64: 1>, scalar_prefetch = 0 : i64, scratch_operands = 0 : i64, tpu.core_type = #tpu.core_type<tc>, window_params = [{transform_indices = @transform_0, window_bounds = array<i64: 8, 256>}, {transform_indices = @transform_1, window_bounds = array<i64: 8, 256>}, {pipeline_mode = #tpu.pipeline_mode<synchronous>, transform_indices = @transform_2, window_bounds = array<i64: 256, 256>}, {transform_indices = @transform_3, window_bounds = array<i64: 1, 1, 256>}]} {
    %c0 = arith.constant 0 : index
    %c0_0 = arith.constant 0 : index
    %0 = vector.load %arg1[%c0, %c0_0] : memref<8x256xf32, #tpu.memory_space<vmem>>, vector<8x256xf32>
    %c0_1 = arith.constant 0 : index
    %c0_2 = arith.constant 0 : index
    %1 = vector.load %arg2[%c0_1, %c0_2] : memref<8x256xf32, #tpu.memory_space<vmem>>, vector<8x256xf32>
    %2 = arith.subf %0, %1 : vector<8x256xf32>
    %3 = arith.truncf %2 : vector<8x256xf32> to vector<8x256xbf16>
    %c0_3 = arith.constant 0 : index
    %c0_4 = arith.constant 0 : index
    %4 = vector.load %arg3[%c0_3, %c0_4] : memref<256x256xbf16, #tpu.memory_space<vmem>>, vector<256x256xbf16>
    %cst = arith.constant dense<0.000000e+00> : vector<8x256xf32>
    %5 = tpu.matmul %3, %4, %cst {dimension_numbers = #tpu.dot_dimension_numbers<[1], [0], [0], [1], [0, 0, 1, 1], [], []>} : vector<8x256xbf16>, vector<256x256xbf16>, vector<8x256xf32> -> vector<8x256xf32>
    %6 = arith.subf %2, %5 : vector<8x256xf32>
    %7 = arith.mulf %6, %6 : vector<8x256xf32>
    %cst_5 = arith.constant dense<0.000000e+00> : vector<256xf32>
    %8 = vector.multi_reduction <add>, %7, %cst_5 [0] : vector<8x256xf32> to vector<256xf32>
    %9 = vector.shape_cast %8 : vector<256xf32> to vector<1x256xf32>
    %c0_6 = arith.constant 0 : index
    %c0_7 = arith.constant 0 : index
    %c0_8 = arith.constant 0 : index
    %10 = vector.load %arg4[%c0_6, %c0_7, %c0_8] : memref<1x1x256xf32, #tpu.memory_space<vmem>>, vector<1x1x256xf32>
    %11 = vector.shape_cast %10 : vector<1x1x256xf32> to vector<1x256xf32>
    %12 = vector.shape_cast %9 : vector<1x256xf32> to vector<1x1x256xf32>
    tpu.vector_store %arg4[%c0_6, %c0_7, %c0_8], %12 {strides = array<i32>} : memref<1x1x256xf32, #tpu.memory_space<vmem>>, vector<1x1x256xf32>,
    return
  }
  func.func @transform_0(%arg0: i32) -> (i32, i32) {
    %c0_i32 = arith.constant 0 : i32
    %c0_i32_0 = arith.constant 0 : i32
    return %arg0, %c0_i32 : i32, i32
  }
  func.func @transform_1(%arg0: i32) -> (i32, i32) {
    %c0_i32 = arith.constant 0 : i32
    %c0_i32_0 = arith.constant 0 : i32
    return %arg0, %c0_i32 : i32, i32
  }
  func.func @transform_2(%arg0: i32) -> (i32, i32) {
    %c0_i32 = arith.constant 0 : i32
    %c0_i32_0 = arith.constant 0 : i32
    %c0_i32_1 = arith.constant 0 : i32
    return %c0_i32, %c0_i32_0 : i32, i32
  }
  func.func @transform_3(%arg0: i32) -> (i32, i32, i32) {
    %c0_i32 = arith.constant 0 : i32
    %c0_i32_0 = arith.constant 0 : i32
    %c0_i32_1 = arith.constant 0 : i32
    return %arg0, %c0_i32, %c0_i32_0 : i32, i32, i32
  }
}

</mosaic_0001>

<llo_original>
// kernel: tpu_custom_call.1
$region0: #{tpu_custom_call.1}
  #allocation0 [shape = 'u32[]', space=smem, size = 0x4, offset = 0x4, fixed_abs, tag = 'smem constant byte address 0x4 - core index']
  #allocation1 [shape = 'u32[72,128]{1,0:T(1,128)}', space=vmem, size = 0x9000, scoped, tag = 'internal scratch']
  %s0 = inlined_call_operand.hbm [shape: f32[8,256], index: 0, kind: input, shape index: {}]
  %s1 = inlined_call_operand.hbm [shape: f32[8,256], index: 1, kind: input, shape index: {}]
  %s2 = inlined_call_operand.hbm [shape: bf16[256,256], index: 2, kind: input, shape index: {}]
  %s3 = inlined_call_operand.hbm [shape: f32[1,1,256], index: 3, kind: output, shape index: {}]
  %s4 = sld [smem:[#allocation0]]
  $region34: #{tpu_custom_call.1} parent=0
    _
  %s6 = ssub.s32 1, %s4
  %s7 = scalar_select 0, %s6, %s4
  $region1: #{tpu_custom_call.1} parent=0
    #allocation2 [shape = 'u8[8192]{0}', space=vmem, size = 0x2000, scoped, tag = 'input window, operand 0, single buffered']
    #allocation3 [shape = 's32[1]{0}', space=sflag, size = 0x4, scoped, tag = 'scoped memory for tpu_custom_call.1']
    #allocation4 [shape = 's32[1]{0}', space=sflag, size = 0x4, scoped, tag = 'scoped memory for tpu_custom_call.1']
    #allocation5 [shape = 'u8[8192]{0}', space=vmem, size = 0x2000, scoped, tag = 'input window, operand 1, single buffered']
    #allocation6 [shape = 's32[1]{0}', space=sflag, size = 0x4, scoped, tag = 'scoped memory for tpu_custom_call.1']
    #allocation7 [shape = 'u8[131072]{0}', space=vmem, size = 0x20000, scoped, tag = 'input window, operand 2, single buffered']
    #allocation8 [shape = 'u8[1024]{0}', space=vmem, size = 0x400, scoped, tag = 'output window, operand 0, single buffered']
    %8 = vsyncpa [#allocation3], 0
    %9 = vsyncpa [#allocation6], 0
    %10 = vsyncpa [#allocation4], 0
    // Predicated region
    $region2: #{tpu_custom_call.1} parent=1 // pred_check
      _
    $region3: #{tpu_custom_call.1} parent=1 // pred_check_branch
      %12 = sbr.rel (0) target = $region5
    $region4: #{tpu_custom_call.1} parent=1 // pred_region
      %14 = vsyncadd [#allocation3], 0
      %s16 = sshll.u32 %s0, 4
      %s17 = int_to_ptr.hbm [resolvable:$true] %s16
      %s18 = sshll.u32 [#allocation2], 4
      %s19 = int_to_ptr.vmem [resolvable:$true] %s18
      %21 = dma.hbm_to_vmem [thread:$0]  %s17, 256, %s19, [#allocation3]
    $region5: #{tpu_custom_call.1} parent=1 // pred_fallthru
      _
    // Predicated region
    $region6: #{tpu_custom_call.1} parent=1 // pred_check
      _
    $region7: #{tpu_custom_call.1} parent=1 // pred_check_branch
      %23 = sbr.rel (0) target = $region9
    $region8: #{tpu_custom_call.1} parent=1 // pred_region
      %25 = vsyncadd [#allocation6], 0
      %s27 = sshll.u32 %s1, 4
      %s28 = int_to_ptr.hbm [resolvable:$true] %s27
      %s29 = sshll.u32 [#allocation5], 4
      %s30 = int_to_ptr.vmem [resolvable:$true] %s29
      %32 = dma.hbm_to_vmem [thread:$0]  %s28, 256, %s30, [#allocation6]
    $region9: #{tpu_custom_call.1} parent=1 // pred_fallthru
      _
    // Predicated region
    $region10: #{tpu_custom_call.1} parent=1 // pred_check
      _
    $region11: #{tpu_custom_call.1} parent=1 // pred_check_branch
      %34 = sbr.rel (0) target = $region13
    $region12: #{tpu_custom_call.1} parent=1 // pred_region
      %36 = vsyncadd [#allocation6], 0
      %s37 = sshll.u32 %s2, 4
      %s38 = int_to_ptr.hbm [resolvable:$true] %s37
      %s39 = sshll.u32 [#allocation7], 4
      %s40 = int_to_ptr.vmem [resolvable:$true] %s39
      %45 = dma.hbm_to_vmem [thread:$0]  %s38, 4096, %s40, [#allocation6], 128, 128, 8
    $region13: #{tpu_custom_call.1} parent=1 // pred_fallthru
      _
    // Predicated region
    $region14: #{tpu_custom_call.1} parent=1 // pred_check
      _
    $region15: #{tpu_custom_call.1} parent=1 // pred_check_branch
      %47 = sbr.rel (0) target = $region17
    $region16: #{tpu_custom_call.1} parent=1 // pred_region
      %49 = dma.done [#allocation3], 256
    $region17: #{tpu_custom_call.1} parent=1 // pred_fallthru
      _
    // Predicated region
    $region18: #{tpu_custom_call.1} parent=1 // pred_check
      _
    $region19: #{tpu_custom_call.1} parent=1 // pred_check_branch
      %51 = sbr.rel (0) target = $region21
    $region20: #{tpu_custom_call.1} parent=1 // pred_region
      %53 = dma.done [#allocation6], 256
    $region21: #{tpu_custom_call.1} parent=1 // pred_fallthru
      _
    // Predicated region
    $region22: #{tpu_custom_call.1} parent=1 // pred_check
      _
    $region23: #{tpu_custom_call.1} parent=1 // pred_check_branch
      %55 = sbr.rel (0) target = $region25
    $region24: #{tpu_custom_call.1} parent=1 // pred_region
      %57 = dma.done [#allocation6], 4096
    $region25: #{tpu_custom_call.1} parent=1 // pred_fallthru
      _
    %v58 = vld [vmem:[#allocation2] sm:$0xff]
    %v59 = vld [vmem:[#allocation2 + $0x8] sm:$0xff]
    %v60 = vld [vmem:[#allocation5] sm:$0xff]
    %v61 = vld [vmem:[#allocation5 + $0x8] sm:$0xff]
    %v62 = vsub.f32 %v58, %v60
    %v63 = vsub.f32 %v59, %v61
    %v64 = vpack.c.bf16 %v62, %v62
    %v65 = vpack.c.bf16 %v63, %v63
    %v66 = vld [vmem:[#allocation7] sm:$0xff]
    %v67 = vld [vmem:[#allocation7 + $0x8] sm:$0xff]
    %v68 = vld [vmem:[#allocation7 + $0x10] sm:$0xff]
    %v69 = vld [vmem:[#allocation7 + $0x18] sm:$0xff]
    %v70 = vld [vmem:[#allocation7 + $0x20] sm:$0xff]
    %v71 = vld [vmem:[#allocation7 + $0x28] sm:$0xff]
    %v72 = vld [vmem:[#allocation7 + $0x30] sm:$0xff]
    %v73 = vld [vmem:[#allocation7 + $0x38] sm:$0xff]
    %v74 = vld [vmem:[#allocation7 + $0x40] sm:$0xff]
    %v75 = vld [vmem:[#allocation7 + $0x48] sm:$0xff]
    %v76 = vld [vmem:[#allocation7 + $0x50] sm:$0xff]
    %v77 = vld [vmem:[#allocation7 + $0x58] sm:$0xff]
    %v78 = vld [vmem:[#allocation7 + $0x60] sm:$0xff]
    %v79 = vld [vmem:[#allocation7 + $0x68] sm:$0xff]
    %v80 = vld [vmem:[#allocation7 + $0x70] sm:$0xff]
    %v81 = vld [vmem:[#allocation7 + $0x78] sm:$0xff]
    %v82 = vld [vmem:[#allocation7 + $0x80] sm:$0xff]
    %v83 = vld [vmem:[#allocation7 + $0x88] sm:$0xff]
    %v84 = vld [vmem:[#allocation7 + $0x90] sm:$0xff]
    %v85 = vld [vmem:[#allocation7 + $0x98] sm:$0xff]
    %v86 = vld [vmem:[#allocation7 + $0xa0] sm:$0xff]
    %v87 = vld [vmem:[#allocation7 + $0xa8] sm:$0xff]
    %v88 = vld [vmem:[#allocation7 + $0xb0] sm:$0xff]
    %v89 = vld [vmem:[#allocation7 + $0xb8] sm:$0xff]
    %v90 = vld [vmem:[#allocation7 + $0xc0] sm:$0xff]
    %v91 = vld [vmem:[#allocation7 + $0xc8] sm:$0xff]
    %v92 = vld [vmem:[#allocation7 + $0xd0] sm:$0xff]
    %v93 = vld [vmem:[#allocation7 + $0xd8] sm:$0xff]
    %v94 = vld [vmem:[#allocation7 + $0xe0] sm:$0xff]
    %v95 = vld [vmem:[#allocation7 + $0xe8] sm:$0xff]
    %v96 = vld [vmem:[#allocation7 + $0xf0] sm:$0xff]
    %v97 = vld [vmem:[#allocation7 + $0xf8] sm:$0xff]
    %v130 = vunpack.c.l.b16 %v66
    %v131 = vunpack.c.h.b16 %v66
    %v132 = vunpack.c.l.b16 %v67
    %v133 = vunpack.c.h.b16 %v67
    %v134 = vunpack.c.l.b16 %v68
    %v135 = vunpack.c.h.b16 %v68
    %v136 = vunpack.c.l.b16 %v69
    %v137 = vunpack.c.h.b16 %v69
    %v138 = vunpack.c.l.b16 %v70
    %v139 = vunpack.c.h.b16 %v70
    %v140 = vunpack.c.l.b16 %v71
    %v141 = vunpack.c.h.b16 %v71
    %v142 = vunpack.c.l.b16 %v72
    %v143 = vunpack.c.h.b16 %v72
    %v144 = vunpack.c.l.b16 %v73
    %v145 = vunpack.c.h.b16 %v73
    %v146 = vunpack.c.l.b16 %v74
    %v147 = vunpack.c.h.b16 %v74
    %v148 = vunpack.c.l.b16 %v75
    %v149 = vunpack.c.h.b16 %v75
    %v150 = vunpack.c.l.b16 %v76
    %v151 = vunpack.c.h.b16 %v76
    %v152 = vunpack.c.l.b16 %v77
    %v153 = vunpack.c.h.b16 %v77
    %v154 = vunpack.c.l.b16 %v78
    %v155 = vunpack.c.h.b16 %v78
    %v156 = vunpack.c.l.b16 %v79
    %v157 = vunpack.c.h.b16 %v79
    %v158 = vunpack.c.l.b16 %v80
    %v159 = vunpack.c.h.b16 %v80
    %v160 = vunpack.c.l.b16 %v81
    %v161 = vunpack.c.h.b16 %v81
    %v162 = vunpack.c.l.b16 %v82
    %v163 = vunpack.c.h.b16 %v82
    %v164 = vunpack.c.l.b16 %v83
    %v165 = vunpack.c.h.b16 %v83
    %v166 = vunpack.c.l.b16 %v84
    %v167 = vunpack.c.h.b16 %v84
    %v168 = vunpack.c.l.b16 %v85
    %v169 = vunpack.c.h.b16 %v85
    %v170 = vunpack.c.l.b16 %v86
    %v171 = vunpack.c.h.b16 %v86
    %v172 = vunpack.c.l.b16 %v87
    %v173 = vunpack.c.h.b16 %v87
    %v174 = vunpack.c.l.b16 %v88
    %v175 = vunpack.c.h.b16 %v88
    %v176 = vunpack.c.l.b16 %v89
    %v177 = vunpack.c.h.b16 %v89
    %v178 = vunpack.c.l.b16 %v90
    %v179 = vunpack.c.h.b16 %v90
    %v180 = vunpack.c.l.b16 %v91
    %v181 = vunpack.c.h.b16 %v91
    %v182 = vunpack.c.l.b16 %v92
    %v183 = vunpack.c.h.b16 %v92
    %v184 = vunpack.c.l.b16 %v93
    %v185 = vunpack.c.h.b16 %v93
    %v186 = vunpack.c.l.b16 %v94
    %v187 = vunpack.c.h.b16 %v94
    %v188 = vunpack.c.l.b16 %v95
    %v189 = vunpack.c.h.b16 %v95
    %v190 = vunpack.c.l.b16 %v96
    %v191 = vunpack.c.h.b16 %v96
    %v192 = vunpack.c.l.b16 %v97
    %v193 = vunpack.c.h.b16 %v97
    %v194 = vpack.c.b16 %v132, %v130
    %v195 = vpack.c.b16 %v133, %v131
    %v196 = vpack.c.b16 %v136, %v134
    %v197 = vpack.c.b16 %v137, %v135
    %v198 = vpack.c.b16 %v140, %v138
    %v199 = vpack.c.b16 %v141, %v139
    %v200 = vpack.c.b16 %v144, %v142
    %v201 = vpack.c.b16 %v145, %v143
    %v202 = vpack.c.b16 %v148, %v146
    %v203 = vpack.c.b16 %v149, %v147
    %v204 = vpack.c.b16 %v152, %v150
    %v205 = vpack.c.b16 %v153, %v151
    %v206 = vpack.c.b16 %v156, %v154
    %v207 = vpack.c.b16 %v157, %v155
    %v208 = vpack.c.b16 %v160, %v158
    %v209 = vpack.c.b16 %v161, %v159
    %v210 = vpack.c.b16 %v164, %v162
    %v211 = vpack.c.b16 %v165, %v163
    %v212 = vpack.c.b16 %v168, %v166
    %v213 = vpack.c.b16 %v169, %v167
    %v214 = vpack.c.b16 %v172, %v170
    %v215 = vpack.c.b16 %v173, %v171
    %v216 = vpack.c.b16 %v176, %v174
    %v217 = vpack.c.b16 %v177, %v175
    %v218 = vpack.c.b16 %v180, %v178
    %v219 = vpack.c.b16 %v181, %v179
    %v220 = vpack.c.b16 %v184, %v182
    %v221 = vpack.c.b16 %v185, %v183
    %v222 = vpack.c.b16 %v188, %v186
    %v223 = vpack.c.b16 %v189, %v187
    %v224 = vpack.c.b16 %v192, %v190
    %v225 = vpack.c.b16 %v193, %v191
    %258 = vmatpush.bf16.msra.mxu0 %v208
    %259 = vmatpush.bf16.msra.mxu0 %v206
    %260 = vmatpush.bf16.msra.mxu0 %v204
    %261 = vmatpush.bf16.msra.mxu0 %v202
    %262 = vmatpush.bf16.msra.mxu0 %v200
    %263 = vmatpush.bf16.msra.mxu0 %v198
    %264 = vmatpush.bf16.msra.mxu0 %v196
    %265 = vmatpush.bf16.msra.mxu0 %v194
    %266 = vmatmul.bf16.gmra.mxu0 %v64
    %v267 = vpop.f32.mrf.mxu0
    %v268 = vadd.f32 0.0, %v267
    %v269 = vpop.f32.mrf.mxu0
    %270 = vdwg.mxu0
    %271 = vmatpush.bf16.msra.mxu0 %v224
    %272 = vmatpush.bf16.msra.mxu0 %v222
    %273 = vmatpush.bf16.msra.mxu0 %v220
    %274 = vmatpush.bf16.msra.mxu0 %v218
    %275 = vmatpush.bf16.msra.mxu0 %v216
    %276 = vmatpush.bf16.msra.mxu0 %v214
    %277 = vmatpush.bf16.msra.mxu0 %v212
    %278 = vmatpush.bf16.msra.mxu0 %v210
    %279 = vmatmul.bf16.gmra.mxu0 %v65
    %v280 = vpop.f32.mrf.mxu0
    %v281 = vadd.f32 %v268, %v280
    %v282 = vpop.f32.mrf.mxu0
    %283 = vdwg.mxu0
    %284 = vmatpush.bf16.msra.mxu0 %v209
    %285 = vmatpush.bf16.msra.mxu0 %v207
    %286 = vmatpush.bf16.msra.mxu0 %v205
    %287 = vmatpush.bf16.msra.mxu0 %v203
    %288 = vmatpush.bf16.msra.mxu0 %v201
    %289 = vmatpush.bf16.msra.mxu0 %v199
    %290 = vmatpush.bf16.msra.mxu0 %v197
    %291 = vmatpush.bf16.msra.mxu0 %v195
    %292 = vmatmul.bf16.gmra.mxu0 %v64
    %v293 = vpop.f32.mrf.mxu0
    %v294 = vadd.f32 0.0, %v293
    %v295 = vpop.f32.mrf.mxu0
    %296 = vdwg.mxu0
    %297 = vmatpush.bf16.msra.mxu0 %v225
    %298 = vmatpush.bf16.msra.mxu0 %v223
    %299 = vmatpush.bf16.msra.mxu0 %v221
    %300 = vmatpush.bf16.msra.mxu0 %v219
    %301 = vmatpush.bf16.msra.mxu0 %v217
    %302 = vmatpush.bf16.msra.mxu0 %v215
    %303 = vmatpush.bf16.msra.mxu0 %v213
    %304 = vmatpush.bf16.msra.mxu0 %v211
    %305 = vmatmul.bf16.gmra.mxu0 %v65
    %v306 = vpop.f32.mrf.mxu0
    %v307 = vadd.f32 %v294, %v306
    %v308 = vpop.f32.mrf.mxu0
    %309 = vdwg.mxu0
    %v310 = vsub.f32 %v62, %v281
    %v311 = vsub.f32 %v63, %v307
    %v312 = vmul.f32 %v310, %v310
    %v313 = vmul.f32 %v311, %v311
    %v314 = vrot.slane %v312, 4
    %v315 = vadd.f32 %v312, %v314
    %v316 = vrot.slane %v315, 2
    %v317 = vadd.f32 %v315, %v316
    %v318 = vrot.slane %v317, 1
    %v319 = vadd.f32 %v317, %v318
    %v320 = vrot.slane %v313, 4
    %v321 = vadd.f32 %v313, %v320
    %v322 = vrot.slane %v321, 2
    %v323 = vadd.f32 %v321, %v322
    %v324 = vrot.slane %v323, 1
    %v325 = vadd.f32 %v323, %v324
    %v328 = vrot.slane %v325, 7
    %vm329 = vcmask 1040384
    %v330 = vsel %vm329, %v319, %v328
    %v332 = vlaneseq
    %vm333 = vcmp.ge.s32.totalorder %v332, 0
    %vm334 = vcmp.lt.s32.totalorder %v332, 256
    %vm335 = vmand %vm333, %vm334
    %336 = vst.msk [vmem:[#allocation8] sm:$0x3] %vm335, %v330
    // Predicated region
    $region26: #{tpu_custom_call.1} parent=1 // pred_check
      _
    $region27: #{tpu_custom_call.1} parent=1 // pred_check_branch
      %338 = sbr.rel (0) target = $region29
    $region28: #{tpu_custom_call.1} parent=1 // pred_region
      %340 = vsyncadd [#allocation4], 0
      %s342 = sshll.u32 [#allocation8], 4
      %s343 = int_to_ptr.vmem [resolvable:$true] %s342
      %s344 = sshll.u32 %s3, 4
      %s345 = int_to_ptr.hbm [resolvable:$true] %s344
      %347 = dma.vmem_to_hbm [thread:$0]  %s343, 32, %s345, [#allocation4]
    $region29: #{tpu_custom_call.1} parent=1 // pred_fallthru
      _
    // Predicated region
    $region30: #{tpu_custom_call.1} parent=1 // pred_check
      _
    $region31: #{tpu_custom_call.1} parent=1 // pred_check_branch
      %349 = sbr.rel (0) target = $region33
    $region32: #{tpu_custom_call.1} parent=1 // pred_region
      %351 = dma.done [#allocation4], 32
    $region33: #{tpu_custom_call.1} parent=1 // pred_fallthru
      _
    %352 = vsyncpa [#allocation3], 1
    %353 = vsyncpa [#allocation6], 1
    %354 = vsyncpa [#allocation4], 1

</llo_original>
